<compile_context>
chip_gen: v5e
topology: v5e:2x2
jax: 0.10.0
libtpu: 0.0.40
codegen_flags: <defaults>
</compile_context>

<pallas_src>
import functools

import jax
import jax.numpy as jnp
from jax import lax
from jax.experimental import pallas as pl
from jax.experimental.pallas import tpu as pltpu


def _bilstm_kernel(xs_ref, wih_ref, whh_ref, b_ref, hc0_ref,
                   ysf_ref, ysb_ref,
                   h_st, c_st, xproj):
    """One grid step = one time chunk of the fused bidirectional recurrence."""
    T = xs_ref.shape[0]          # chunk length (time steps in this block)
    H2 = h_st.shape[1]           # 2 * H   ([fwd | bwd] state width)
    H = H2 // 2
    S = 3 * H2                   # 6H: width of the contiguous sigmoid block

    # Initialise the carried state (h, c) from (h0, c0) on the first chunk.
    @pl.when(pl.program_id(0) == 0)
    def _():
        h_st[...] = hc0_ref[0:1, :]
        c_st[...] = hc0_ref[1:2, :]

    # Input projection for the whole chunk, BOTH directions, one MXU call:
    # xs_ref rows are [x_t | x_{N-1-t}], wih_ref is block-diagonal (2Din, 8H).
    xproj[...] = (jnp.dot(xs_ref[...], wih_ref[...],
                          preferred_element_type=jnp.float32)
                  + b_ref[...])

    whh = whh_ref[...]           # (2H, 8H), pre-transposed, loop-invariant.

    def step(s, carry):
        h, c = carry
        # One (1,2H)@(2H,8H) matmul yields all 8 gate blocks for both dirs.
        gates = xproj[pl.ds(s, 1), :] + jnp.dot(
            h, whh, preferred_element_type=jnp.float32)
        sig = jax.nn.sigmoid(gates[:, :S])   # [i_f, i_b, f_f, f_b, o_f, o_b]
        g = jnp.tanh(gates[:, S:])           # [g_f, g_b]
        i = sig[:, 0:H2]
        f = sig[:, H2:2 * H2]
        o = sig[:, 2 * H2:3 * H2]
        c_new = f * c + i * g
        h_new = o * jnp.tanh(c_new)
        # Forward half -> row s of this chunk's forward output block;
        # backward half -> mirrored row of the mirrored backward output block.
        ysf_ref[pl.ds(s, 1), :] = h_new[:, :H].astype(ysf_ref.dtype)
        ysb_ref[pl.ds(T - 1 - s, 1), :] = h_new[:, H:].astype(ysb_ref.dtype)
        return (h_new, c_new)

    unroll = 8 if T % 8 == 0 else 1
    h, c = lax.fori_loop(0, T, step, (h_st[...], c_st[...]), unroll=unroll)

    # Carry the state into the next time chunk.
    h_st[...] = h
    c_st[...] = c


def _pack_params(p):
    """Host-side layout plumbing (done once, outside the kernel):
    transpose the weights, reorder gates to (i, f, o, g) and interleave the two
    directions per gate so the kernel does one wide sigmoid + one tanh and
    never transposes.  Combined column layout:
    [i_f, i_b, f_f, f_b, o_f, o_b, g_f, g_b]."""
    H = p["h0_f"].shape[1]
    Din = p["wih_f"].shape[1]

    def blocks(w):               # w: (K, 4H), PyTorch gate order (i, f, g, o)
        return (w[:, 0:H], w[:, H:2 * H],                     # i, f
                w[:, 3 * H:4 * H], w[:, 2 * H:3 * H])         # o, g

    # Combined input weight (2*Din, 8H): block-diagonal per direction.
    i_f, f_f, o_f, g_f = blocks(p["wih_f"].T)
    i_b, f_b, o_b, g_b = blocks(p["wih_b"].T)
    z = jnp.zeros((Din, H), jnp.float32)
    wih = jnp.concatenate([
        jnp.concatenate([i_f, z, f_f, z, o_f, z, g_f, z], axis=1),
        jnp.concatenate([z, i_b, z, f_b, z, o_b, z, g_b], axis=1)], axis=0)

    # Combined recurrent weight (2H, 8H): block-diagonal per direction.
    ri_f, rf_f, ro_f, rg_f = blocks(p["whh_f"].T)
    ri_b, rf_b, ro_b, rg_b = blocks(p["whh_b"].T)
    zh = jnp.zeros((H, H), jnp.float32)
    whh = jnp.concatenate([
        jnp.concatenate([ri_f, zh, rf_f, zh, ro_f, zh, rg_f, zh], axis=1),
        jnp.concatenate([zh, ri_b, zh, rf_b, zh, ro_b, zh, rg_b], axis=1)],
        axis=0)

    bi_f, bf_f, bo_f, bg_f = blocks(p["b_f"])
    bi_b, bf_b, bo_b, bg_b = blocks(p["b_b"])
    b = jnp.concatenate([bi_f, bi_b, bf_f, bf_b, bo_f, bo_b, bg_f, bg_b],
                        axis=1)                                # (1, 8H)

    hc0 = jnp.concatenate([
        jnp.concatenate([p["h0_f"], p["h0_b"]], axis=1),
        jnp.concatenate([p["c0_f"], p["c0_b"]], axis=1)], axis=0)   # (2, 2H)
    return wih, whh, b, hc0


def _pick_chunk(n, target=128):
    """Largest multiple of 8 <= target that divides n; else the whole seq."""
    if n <= target:
        return n
    for t in range(target - target % 8, 7, -8):
        if n % t == 0:
            return t
    return n   # fall back to a single chunk


@functools.partial(jax.jit, static_argnames=("chunk",))
def simple_bilstm_pallas(xs, params, *, chunk=None):
    """xs: [N, Din] float32 -> [N, Dout] float32, Dout = 2 * H."""
    N, Din = xs.shape
    H = params["h0_f"].shape[1]

    T = _pick_chunk(N) if chunk is None else chunk
    assert N % T == 0, (N, T)
    num_chunks = N // T

    wih, whh, b, hc0 = _pack_params(params)

    # Backward direction consumes the reversed sequence; pack it as extra
    # feature columns so one chunked load + one matmul serves both directions.
    xs_comb = jnp.concatenate([xs, xs[::-1]], axis=-1)         # (N, 2*Din)

    flops = 2 * N * 8 * H * (2 * Din + 2 * H)
    transcendentals = 10 * H * N
    bytes_accessed = 4 * (N * 2 * Din + 2 * Din * 8 * H + 2 * H * 8 * H
                          + 12 * H + 2 * N * H)

    grid_spec = pltpu.PrefetchScalarGridSpec(
        num_scalar_prefetch=0,
        grid=(num_chunks,),
        in_specs=[
            pl.BlockSpec((T, 2 * Din), lambda c: (c, 0)),          # xs chunk
            pl.BlockSpec((2 * Din, 8 * H), lambda c: (0, 0)),      # W_ih (resident)
            pl.BlockSpec((2 * H, 8 * H), lambda c: (0, 0)),        # W_hh (resident)
            pl.BlockSpec((1, 8 * H), lambda c: (0, 0)),            # bias
            pl.BlockSpec((2, 2 * H), lambda c: (0, 0)),            # (h0, c0)
        ],
        out_specs=(
            pl.BlockSpec((T, H), lambda c: (c, 0)),                   # fwd ys
            pl.BlockSpec((T, H), lambda c: (num_chunks - 1 - c, 0)),  # bwd ys
        ),
        scratch_shapes=[
            pltpu.VMEM((1, 2 * H), jnp.float32),    # carried h  [fwd | bwd]
            pltpu.VMEM((1, 2 * H), jnp.float32),    # carried c  [fwd | bwd]
            pltpu.VMEM((T, 8 * H), jnp.float32),    # per-chunk input projection
        ],
    )

    ys_f, ys_b = pl.pallas_call(
        _bilstm_kernel,
        out_shape=(jax.ShapeDtypeStruct((N, H), jnp.float32),
                   jax.ShapeDtypeStruct((N, H), jnp.float32)),
        grid_spec=grid_spec,
        compiler_params=pltpu.CompilerParams(
            dimension_semantics=("arbitrary",),        # sequential state carry
            vmem_limit_bytes=32 * 1024 * 1024),        # safe on v5e/v6e/v7x
        cost_estimate=pl.CostEstimate(
            flops=flops, transcendentals=transcendentals,
            bytes_accessed=bytes_accessed),
    )(xs_comb, wih, whh, b, hc0)

    # Two (N, H) outputs (not one (N, 2H)) because the backward output block
    # index runs mirrored across the time-chunk grid; at production sizes
    # (H a multiple of 128) both stores are lane-dense and this concat is one
    # cheap mem-bound XLA op.
    return jnp.concatenate([ys_f, ys_b], axis=-1)


# ---------- pure-JAX reference (mirrors the PyTorch forward) ----------
def _lstm_ref(xs, wih, whh, b, h0, c0):
    H = h0.shape[1]

    def step(carry, x):
        h, c = carry
        gates = x[None, :] @ wih.T + h @ whh.T + b
        i = jax.nn.sigmoid(gates[:, 0 * H:1 * H])
        f = jax.nn.sigmoid(gates[:, 1 * H:2 * H])
        g = jnp.tanh(gates[:, 2 * H:3 * H])
        o = jax.nn.sigmoid(gates[:, 3 * H:4 * H])
        c_new = f * c + i * g
        h_new = o * jnp.tanh(c_new)
        return (h_new, c_new), h_new[0]

    _, ys = lax.scan(step, (h0, c0), xs)
    return ys


def simple_bilstm_ref(xs, p):
    ys1 = _lstm_ref(xs, p["wih_f"], p["whh_f"], p["b_f"], p["h0_f"], p["c0_f"])
    ys2 = _lstm_ref(xs[::-1], p["wih_b"], p["whh_b"], p["b_b"],
                    p["h0_b"], p["c0_b"])[::-1]
    return jnp.concatenate([ys1, ys2], axis=-1)


def init_params(key, inp_size, out_size):
    assert out_size % 2 == 0
    H = out_size // 2
    ks = jax.random.split(key, 12)
    bound = 1.0 / jnp.sqrt(H)

    def u(k, shape):
        return jax.random.uniform(k, shape, jnp.float32, -bound, bound)

    # PyTorch LSTMCell has bias_ih and bias_hh; fold into one bias (1, 4H).
    return {
        "wih_f": u(ks[0], (4 * H, inp_size)),
        "whh_f": u(ks[1], (4 * H, H)),
        "b_f":   u(ks[2], (1, 4 * H)) + u(ks[3], (1, 4 * H)),
        "h0_f":  jax.random.normal(ks[4], (1, H), jnp.float32),
        "c0_f":  jax.random.normal(ks[5], (1, H), jnp.float32),
        "wih_b": u(ks[6], (4 * H, inp_size)),
        "whh_b": u(ks[7], (4 * H, H)),
        "b_b":   u(ks[8], (1, 4 * H)) + u(ks[9], (1, 4 * H)),
        "h0_b":  jax.random.normal(ks[10], (1, H), jnp.float32),
        "c0_b":  jax.random.normal(ks[11], (1, H), jnp.float32),
    }


if __name__ == "__main__":
    key = jax.random.PRNGKey(0)
    k_x, k_p, k_x2, k_p2 = jax.random.split(key, 4)

    # Case 1: small single-chunk sequence (N = 8, Din = 16, Dout = 32).
    N, Din, Dout = 8, 16, 32
    xs = jax.random.normal(k_x, (N, Din), jnp.float32)
    params = init_params(k_p, Din, Dout)
    ys = jax.block_until_ready(simple_bilstm_pallas(xs, params))
    assert ys.shape == (N, Dout), ys.shape
    ys_ref = simple_bilstm_ref(xs, params)
    assert jnp.allclose(ys, ys_ref, rtol=1e-4, atol=1e-4), (
        float(jnp.max(jnp.abs(ys - ys_ref))))

    # Case 2: multi-chunk grid (N = 32, chunk = 8) exercising the carried
    # (h, c) state and the mirrored backward output blocks.
    N2 = 32
    xs2 = jax.random.normal(k_x2, (N2, Din), jnp.float32)
    params2 = init_params(k_p2, Din, Dout)
    ys2 = jax.block_until_ready(simple_bilstm_pallas(xs2, params2, chunk=8))
    assert ys2.shape == (N2, Dout), ys2.shape
    ys2_ref = simple_bilstm_ref(xs2, params2)
    assert jnp.allclose(ys2, ys2_ref, rtol=1e-4, atol=1e-4), (
        float(jnp.max(jnp.abs(ys2 - ys2_ref))))

    print("KERNEL_OK")
</pallas_src>

<mosaic_0001>
module attributes {stable_mosaic.version = 11 : i64} {
  func.func @_bilstm_kernel(%arg0: i32, %arg1: memref<8x32xf32, #tpu.memory_space<vmem>>, %arg2: memref<32x128xf32, #tpu.memory_space<vmem>>, %arg3: memref<32x128xf32, #tpu.memory_space<vmem>>, %arg4: memref<1x128xf32, #tpu.memory_space<vmem>>, %arg5: memref<2x32xf32, #tpu.memory_space<vmem>>, %arg6: memref<8x16xf32, #tpu.memory_space<vmem>>, %arg7: memref<8x16xf32, #tpu.memory_space<vmem>>, %arg8: memref<1x32xf32, #tpu.memory_space<vmem>>, %arg9: memref<1x32xf32, #tpu.memory_space<vmem>>, %arg10: memref<8x128xf32, #tpu.memory_space<vmem>>) attributes {dimension_semantics = [#tpu.dimension_semantics<arbitrary>], iteration_bounds = array<i64: 1>, scalar_prefetch = 0 : i64, scratch_operands = 3 : i64, tpu.core_type = #tpu.core_type<tc>, window_params = [{transform_indices = @transform_0, window_bounds = array<i64: 8, 32>}, {pipeline_mode = #tpu.pipeline_mode<synchronous>, transform_indices = @transform_1, window_bounds = array<i64: 32, 128>}, {pipeline_mode = #tpu.pipeline_mode<synchronous>, transform_indices = @transform_2, window_bounds = array<i64: 32, 128>}, {pipeline_mode = #tpu.pipeline_mode<synchronous>, transform_indices = @transform_3, window_bounds = array<i64: 1, 128>}, {pipeline_mode = #tpu.pipeline_mode<synchronous>, transform_indices = @transform_4, window_bounds = array<i64: 2, 32>}, {transform_indices = @transform_5, window_bounds = array<i64: 8, 16>}, {transform_indices = @transform_6, window_bounds = array<i64: 8, 16>}]} {
    %c0_i32 = arith.constant 0 : i32
    %0 = arith.cmpi eq, %arg0, %c0_i32 : i32
    %1 = arith.extui %0 : i1 to i32
    %c0_i32_0 = arith.constant 0 : i32
    %2 = arith.cmpi ne, %1, %c0_i32_0 : i32
    scf.if %2 {
      %c0_67 = arith.constant 0 : index
      %c0_68 = arith.constant 0 : index
      %231 = vector.load %arg5[%c0_67, %c0_68] : memref<2x32xf32, #tpu.memory_space<vmem>>, vector<1x32xf32>
      %c0_69 = arith.constant 0 : index
      %c0_70 = arith.constant 0 : index
      %232 = vector.load %arg8[%c0_69, %c0_70] : memref<1x32xf32, #tpu.memory_space<vmem>>, vector<1x32xf32>
      tpu.vector_store %arg8[%c0_69, %c0_70], %231 {strides = array<i32>} : memref<1x32xf32, #tpu.memory_space<vmem>>, vector<1x32xf32>,
      %c1 = arith.constant 1 : index
      %c0_71 = arith.constant 0 : index
      %233 = vector.load %arg5[%c1, %c0_71] : memref<2x32xf32, #tpu.memory_space<vmem>>, vector<1x32xf32>
      %c0_72 = arith.constant 0 : index
      %c0_73 = arith.constant 0 : index
      %234 = vector.load %arg9[%c0_72, %c0_73] : memref<1x32xf32, #tpu.memory_space<vmem>>, vector<1x32xf32>
      tpu.vector_store %arg9[%c0_72, %c0_73], %233 {strides = array<i32>} : memref<1x32xf32, #tpu.memory_space<vmem>>, vector<1x32xf32>,
    } else {
    }
    %c0 = arith.constant 0 : index
    %c0_1 = arith.constant 0 : index
    %3 = vector.load %arg1[%c0, %c0_1] : memref<8x32xf32, #tpu.memory_space<vmem>>, vector<8x32xf32>
    %c0_2 = arith.constant 0 : index
    %c0_3 = arith.constant 0 : index
    %4 = vector.load %arg2[%c0_2, %c0_3] : memref<32x128xf32, #tpu.memory_space<vmem>>, vector<32x128xf32>
    %cst = arith.constant dense<0.000000e+00> : vector<8x128xf32>
    %5 = tpu.matmul %3, %4, %cst {dimension_numbers = #tpu.dot_dimension_numbers<[1], [0], [0], [1], [0, 0, 1, 1], [], []>} : vector<8x32xf32>, vector<32x128xf32>, vector<8x128xf32> -> vector<8x128xf32>
    %c0_4 = arith.constant 0 : index
    %c0_5 = arith.constant 0 : index
    %6 = vector.load %arg4[%c0_4, %c0_5] : memref<1x128xf32, #tpu.memory_space<vmem>>, vector<1x128xf32>
    %7 = vector.broadcast %6 : vector<1x128xf32> to vector<8x128xf32>
    %8 = arith.addf %5, %7 : vector<8x128xf32>
    %c0_6 = arith.constant 0 : index
    %c0_7 = arith.constant 0 : index
    %9 = vector.load %arg10[%c0_6, %c0_7] : memref<8x128xf32, #tpu.memory_space<vmem>>, vector<8x128xf32>
    tpu.vector_store %arg10[%c0_6, %c0_7], %8 {strides = array<i32>} : memref<8x128xf32, #tpu.memory_space<vmem>>, vector<8x128xf32>,
    %c0_8 = arith.constant 0 : index
    %c0_9 = arith.constant 0 : index
    %10 = vector.load %arg3[%c0_8, %c0_9] : memref<32x128xf32, #tpu.memory_space<vmem>>, vector<32x128xf32>
    %c0_10 = arith.constant 0 : index
    %c0_11 = arith.constant 0 : index
    %11 = vector.load %arg8[%c0_10, %c0_11] : memref<1x32xf32, #tpu.memory_space<vmem>>, vector<1x32xf32>
    %c0_12 = arith.constant 0 : index
    %c0_13 = arith.constant 0 : index
    %12 = vector.load %arg9[%c0_12, %c0_13] : memref<1x32xf32, #tpu.memory_space<vmem>>, vector<1x32xf32>
    %c0_i32_14 = arith.constant 0 : i32
    %13 = arith.index_cast %c0_i32_14 : i32 to index
    %c0_15 = arith.constant 0 : index
    %14 = vector.load %arg10[%13, %c0_15] : memref<8x128xf32, #tpu.memory_space<vmem>>, vector<1x128xf32>
    %cst_16 = arith.constant dense<0.000000e+00> : vector<1x128xf32>
    %15 = tpu.matmul %11, %10, %cst_16 {dimension_numbers = #tpu.dot_dimension_numbers<[1], [0], [0], [1], [0, 0, 1, 1], [], []>} : vector<1x32xf32>, vector<32x128xf32>, vector<1x128xf32> -> vector<1x128xf32>
    %16 = arith.addf %14, %15 : vector<1x128xf32>
    %17 = vector.extract_strided_slice %16 {offsets = [0, 0], sizes = [1, 96], strides = [1, 1]} : vector<1x128xf32> to vector<1x96xf32>
    %18 = arith.negf %17 : vector<1x96xf32>
    %19 = math.exp %18 : vector<1x96xf32>
    %cst_17 = arith.constant 1.000000e+00 : f32
    %20 = vector.broadcast %cst_17 : f32 to vector<1x96xf32>
    %21 = arith.addf %20, %19 : vector<1x96xf32>
    %22 = arith.divf %20, %21 : vector<1x96xf32>
    %23 = vector.extract_strided_slice %16 {offsets = [0, 96], sizes = [1, 32], strides = [1, 1]} : vector<1x128xf32> to vector<1x32xf32>
    %24 = math.tanh %23 : vector<1x32xf32>
    %25 = vector.extract_strided_slice %22 {offsets = [0, 0], sizes = [1, 32], strides = [1, 1]} : vector<1x96xf32> to vector<1x32xf32>
    %26 = vector.extract_strided_slice %22 {offsets = [0, 32], sizes = [1, 32], strides = [1, 1]} : vector<1x96xf32> to vector<1x32xf32>
    %27 = vector.extract_strided_slice %22 {offsets = [0, 64], sizes = [1, 32], strides = [1, 1]} : vector<1x96xf32> to vector<1x32xf32>
    %28 = arith.mulf %26, %12 : vector<1x32xf32>
    %29 = arith.mulf %25, %24 : vector<1x32xf32>
    %30 = arith.addf %28, %29 : vector<1x32xf32>
    %31 = math.tanh %30 : vector<1x32xf32>
    %32 = arith.mulf %27, %31 : vector<1x32xf32>
    %33 = vector.extract_strided_slice %32 {offsets = [0, 0], sizes = [1, 16], strides = [1, 1]} : vector<1x32xf32> to vector<1x16xf32>
    %34 = arith.index_cast %c0_i32_14 : i32 to index
    %c0_18 = arith.constant 0 : index
    %35 = vector.load %arg6[%34, %c0_18] : memref<8x16xf32, #tpu.memory_space<vmem>>, vector<1x16xf32>
    tpu.vector_store %arg6[%34, %c0_18], %33 {strides = array<i32>} : memref<8x16xf32, #tpu.memory_space<vmem>>, vector<1x16xf32>,
    %36 = vector.extract_strided_slice %32 {offsets = [0, 16], sizes = [1, 16], strides = [1, 1]} : vector<1x32xf32> to vector<1x16xf32>
    %c7_i32 = arith.constant 7 : i32
    %37 = arith.subi %c7_i32, %c0_i32_14 : i32
    %38 = arith.index_cast %37 : i32 to index
    %c0_19 = arith.constant 0 : index
    %39 = vector.load %arg7[%38, %c0_19] : memref<8x16xf32, #tpu.memory_space<vmem>>, vector<1x16xf32>
    tpu.vector_store %arg7[%38, %c0_19], %36 {strides = array<i32>} : memref<8x16xf32, #tpu.memory_space<vmem>>, vector<1x16xf32>,
    %c1_i32 = arith.constant 1 : i32
    %40 = arith.index_cast %c1_i32 : i32 to index
    %c0_20 = arith.constant 0 : index
    %41 = vector.load %arg10[%40, %c0_20] : memref<8x128xf32, #tpu.memory_space<vmem>>, vector<1x128xf32>
    %cst_21 = arith.constant dense<0.000000e+00> : vector<1x128xf32>
    %42 = tpu.matmul %32, %10, %cst_21 {dimension_numbers = #tpu.dot_dimension_numbers<[1], [0], [0], [1], [0, 0, 1, 1], [], []>} : vector<1x32xf32>, vector<32x128xf32>, vector<1x128xf32> -> vector<1x128xf32>
    %43 = arith.addf %41, %42 : vector<1x128xf32>
    %44 = vector.extract_strided_slice %43 {offsets = [0, 0], sizes = [1, 96], strides = [1, 1]} : vector<1x128xf32> to vector<1x96xf32>
    %45 = arith.negf %44 : vector<1x96xf32>
    %46 = math.exp %45 : vector<1x96xf32>
    %cst_22 = arith.constant 1.000000e+00 : f32
    %47 = vector.broadcast %cst_22 : f32 to vector<1x96xf32>
    %48 = arith.addf %47, %46 : vector<1x96xf32>
    %49 = arith.divf %47, %48 : vector<1x96xf32>
    %50 = vector.extract_strided_slice %43 {offsets = [0, 96], sizes = [1, 32], strides = [1, 1]} : vector<1x128xf32> to vector<1x32xf32>
    %51 = math.tanh %50 : vector<1x32xf32>
    %52 = vector.extract_strided_slice %49 {offsets = [0, 0], sizes = [1, 32], strides = [1, 1]} : vector<1x96xf32> to vector<1x32xf32>
    %53 = vector.extract_strided_slice %49 {offsets = [0, 32], sizes = [1, 32], strides = [1, 1]} : vector<1x96xf32> to vector<1x32xf32>
    %54 = vector.extract_strided_slice %49 {offsets = [0, 64], sizes = [1, 32], strides = [1, 1]} : vector<1x96xf32> to vector<1x32xf32>
    %55 = arith.mulf %53, %30 : vector<1x32xf32>
    %56 = arith.mulf %52, %51 : vector<1x32xf32>
    %57 = arith.addf %55, %56 : vector<1x32xf32>
    %58 = math.tanh %57 : vector<1x32xf32>
    %59 = arith.mulf %54, %58 : vector<1x32xf32>
    %60 = vector.extract_strided_slice %59 {offsets = [0, 0], sizes = [1, 16], strides = [1, 1]} : vector<1x32xf32> to vector<1x16xf32>
    %61 = arith.index_cast %c1_i32 : i32 to index
    %c0_23 = arith.constant 0 : index
    %62 = vector.load %arg6[%61, %c0_23] : memref<8x16xf32, #tpu.memory_space<vmem>>, vector<1x16xf32>
    tpu.vector_store %arg6[%61, %c0_23], %60 {strides = array<i32>} : memref<8x16xf32, #tpu.memory_space<vmem>>, vector<1x16xf32>,
    %63 = vector.extract_strided_slice %59 {offsets = [0, 16], sizes = [1, 16], strides = [1, 1]} : vector<1x32xf32> to vector<1x16xf32>
    %c7_i32_24 = arith.constant 7 : i32
    %64 = arith.subi %c7_i32_24, %c1_i32 : i32
    %65 = arith.index_cast %64 : i32 to index
    %c0_25 = arith.constant 0 : index
    %66 = vector.load %arg7[%65, %c0_25] : memref<8x16xf32, #tpu.memory_space<vmem>>, vector<1x16xf32>
    tpu.vector_store %arg7[%65, %c0_25], %63 {strides = array<i32>} : memref<8x16xf32, #tpu.memory_space<vmem>>, vector<1x16xf32>,
    %c2_i32 = arith.constant 2 : i32
    %67 = arith.index_cast %c2_i32 : i32 to index
    %c0_26 = arith.constant 0 : index
    %68 = vector.load %arg10[%67, %c0_26] : memref<8x128xf32, #tpu.memory_space<vmem>>, vector<1x128xf32>
    %cst_27 = arith.constant dense<0.000000e+00> : vector<1x128xf32>
    %69 = tpu.matmul %59, %10, %cst_27 {dimension_numbers = #tpu.dot_dimension_numbers<[1], [0], [0], [1], [0, 0, 1, 1], [], []>} : vector<1x32xf32>, vector<32x128xf32>, vector<1x128xf32> -> vector<1x128xf32>
    %70 = arith.addf %68, %69 : vector<1x128xf32>
    %71 = vector.extract_strided_slice %70 {offsets = [0, 0], sizes = [1, 96], strides = [1, 1]} : vector<1x128xf32> to vector<1x96xf32>
    %72 = arith.negf %71 : vector<1x96xf32>
    %73 = math.exp %72 : vector<1x96xf32>
    %cst_28 = arith.constant 1.000000e+00 : f32
    %74 = vector.broadcast %cst_28 : f32 to vector<1x96xf32>
    %75 = arith.addf %74, %73 : vector<1x96xf32>
    %76 = arith.divf %74, %75 : vector<1x96xf32>
    %77 = vector.extract_strided_slice %70 {offsets = [0, 96], sizes = [1, 32], strides = [1, 1]} : vector<1x128xf32> to vector<1x32xf32>
    %78 = math.tanh %77 : vector<1x32xf32>
    %79 = vector.extract_strided_slice %76 {offsets = [0, 0], sizes = [1, 32], strides = [1, 1]} : vector<1x96xf32> to vector<1x32xf32>
    %80 = vector.extract_strided_slice %76 {offsets = [0, 32], sizes = [1, 32], strides = [1, 1]} : vector<1x96xf32> to vector<1x32xf32>
    %81 = vector.extract_strided_slice %76 {offsets = [0, 64], sizes = [1, 32], strides = [1, 1]} : vector<1x96xf32> to vector<1x32xf32>
    %82 = arith.mulf %80, %57 : vector<1x32xf32>
    %83 = arith.mulf %79, %78 : vector<1x32xf32>
    %84 = arith.addf %82, %83 : vector<1x32xf32>
    %85 = math.tanh %84 : vector<1x32xf32>
    %86 = arith.mulf %81, %85 : vector<1x32xf32>
    %87 = vector.extract_strided_slice %86 {offsets = [0, 0], sizes = [1, 16], strides = [1, 1]} : vector<1x32xf32> to vector<1x16xf32>
    %88 = arith.index_cast %c2_i32 : i32 to index
    %c0_29 = arith.constant 0 : index
    %89 = vector.load %arg6[%88, %c0_29] : memref<8x16xf32, #tpu.memory_space<vmem>>, vector<1x16xf32>
    tpu.vector_store %arg6[%88, %c0_29], %87 {strides = array<i32>} : memref<8x16xf32, #tpu.memory_space<vmem>>, vector<1x16xf32>,
    %90 = vector.extract_strided_slice %86 {offsets = [0, 16], sizes = [1, 16], strides = [1, 1]} : vector<1x32xf32> to vector<1x16xf32>
    %c7_i32_30 = arith.constant 7 : i32
    %91 = arith.subi %c7_i32_30, %c2_i32 : i32
    %92 = arith.index_cast %91 : i32 to index
    %c0_31 = arith.constant 0 : index
    %93 = vector.load %arg7[%92, %c0_31] : memref<8x16xf32, #tpu.memory_space<vmem>>, vector<1x16xf32>
    tpu.vector_store %arg7[%92, %c0_31], %90 {strides = array<i32>} : memref<8x16xf32, #tpu.memory_space<vmem>>, vector<1x16xf32>,
    %c3_i32 = arith.constant 3 : i32
    %94 = arith.index_cast %c3_i32 : i32 to index
    %c0_32 = arith.constant 0 : index
    %95 = vector.load %arg10[%94, %c0_32] : memref<8x128xf32, #tpu.memory_space<vmem>>, vector<1x128xf32>
    %cst_33 = arith.constant dense<0.000000e+00> : vector<1x128xf32>
    %96 = tpu.matmul %86, %10, %cst_33 {dimension_numbers = #tpu.dot_dimension_numbers<[1], [0], [0], [1], [0, 0, 1, 1], [], []>} : vector<1x32xf32>, vector<32x128xf32>, vector<1x128xf32> -> vector<1x128xf32>
    %97 = arith.addf %95, %96 : vector<1x128xf32>
    %98 = vector.extract_strided_slice %97 {offsets = [0, 0], sizes = [1, 96], strides = [1, 1]} : vector<1x128xf32> to vector<1x96xf32>
    %99 = arith.negf %98 : vector<1x96xf32>
    %100 = math.exp %99 : vector<1x96xf32>
    %cst_34 = arith.constant 1.000000e+00 : f32
    %101 = vector.broadcast %cst_34 : f32 to vector<1x96xf32>
    %102 = arith.addf %101, %100 : vector<1x96xf32>
    %103 = arith.divf %101, %102 : vector<1x96xf32>
    %104 = vector.extract_strided_slice %97 {offsets = [0, 96], sizes = [1, 32], strides = [1, 1]} : vector<1x128xf32> to vector<1x32xf32>
    %105 = math.tanh %104 : vector<1x32xf32>
    %106 = vector.extract_strided_slice %103 {offsets = [0, 0], sizes = [1, 32], strides = [1, 1]} : vector<1x96xf32> to vector<1x32xf32>
    %107 = vector.extract_strided_slice %103 {offsets = [0, 32], sizes = [1, 32], strides = [1, 1]} : vector<1x96xf32> to vector<1x32xf32>
    %108 = vector.extract_strided_slice %103 {offsets = [0, 64], sizes = [1, 32], strides = [1, 1]} : vector<1x96xf32> to vector<1x32xf32>
    %109 = arith.mulf %107, %84 : vector<1x32xf32>
    %110 = arith.mulf %106, %105 : vector<1x32xf32>
    %111 = arith.addf %109, %110 : vector<1x32xf32>
    %112 = math.tanh %111 : vector<1x32xf32>
    %113 = arith.mulf %108, %112 : vector<1x32xf32>
    %114 = vector.extract_strided_slice %113 {offsets = [0, 0], sizes = [1, 16], strides = [1, 1]} : vector<1x32xf32> to vector<1x16xf32>
    %115 = arith.index_cast %c3_i32 : i32 to index
    %c0_35 = arith.constant 0 : index
    %116 = vector.load %arg6[%115, %c0_35] : memref<8x16xf32, #tpu.memory_space<vmem>>, vector<1x16xf32>
    tpu.vector_store %arg6[%115, %c0_35], %114 {strides = array<i32>} : memref<8x16xf32, #tpu.memory_space<vmem>>, vector<1x16xf32>,
    %117 = vector.extract_strided_slice %113 {offsets = [0, 16], sizes = [1, 16], strides = [1, 1]} : vector<1x32xf32> to vector<1x16xf32>
    %c7_i32_36 = arith.constant 7 : i32
    %118 = arith.subi %c7_i32_36, %c3_i32 : i32
    %119 = arith.index_cast %118 : i32 to index
    %c0_37 = arith.constant 0 : index
    %120 = vector.load %arg7[%119, %c0_37] : memref<8x16xf32, #tpu.memory_space<vmem>>, vector<1x16xf32>
    tpu.vector_store %arg7[%119, %c0_37], %117 {strides = array<i32>} : memref<8x16xf32, #tpu.memory_space<vmem>>, vector<1x16xf32>,
    %c4_i32 = arith.constant 4 : i32
    %121 = arith.index_cast %c4_i32 : i32 to index
    %c0_38 = arith.constant 0 : index
    %122 = vector.load %arg10[%121, %c0_38] : memref<8x128xf32, #tpu.memory_space<vmem>>, vector<1x128xf32>
    %cst_39 = arith.constant dense<0.000000e+00> : vector<1x128xf32>
    %123 = tpu.matmul %113, %10, %cst_39 {dimension_numbers = #tpu.dot_dimension_numbers<[1], [0], [0], [1], [0, 0, 1, 1], [], []>} : vector<1x32xf32>, vector<32x128xf32>, vector<1x128xf32> -> vector<1x128xf32>
    %124 = arith.addf %122, %123 : vector<1x128xf32>
    %125 = vector.extract_strided_slice %124 {offsets = [0, 0], sizes = [1, 96], strides = [1, 1]} : vector<1x128xf32> to vector<1x96xf32>
    %126 = arith.negf %125 : vector<1x96xf32>
    %127 = math.exp %126 : vector<1x96xf32>
    %cst_40 = arith.constant 1.000000e+00 : f32
    %128 = vector.broadcast %cst_40 : f32 to vector<1x96xf32>
    %129 = arith.addf %128, %127 : vector<1x96xf32>
    %130 = arith.divf %128, %129 : vector<1x96xf32>
    %131 = vector.extract_strided_slice %124 {offsets = [0, 96], sizes = [1, 32], strides = [1, 1]} : vector<1x128xf32> to vector<1x32xf32>
    %132 = math.tanh %131 : vector<1x32xf32>
    %133 = vector.extract_strided_slice %130 {offsets = [0, 0], sizes = [1, 32], strides = [1, 1]} : vector<1x96xf32> to vector<1x32xf32>
    %134 = vector.extract_strided_slice %130 {offsets = [0, 32], sizes = [1, 32], strides = [1, 1]} : vector<1x96xf32> to vector<1x32xf32>
    %135 = vector.extract_strided_slice %130 {offsets = [0, 64], sizes = [1, 32], strides = [1, 1]} : vector<1x96xf32> to vector<1x32xf32>
    %136 = arith.mulf %134, %111 : vector<1x32xf32>
    %137 = arith.mulf %133, %132 : vector<1x32xf32>
    %138 = arith.addf %136, %137 : vector<1x32xf32>
    %139 = math.tanh %138 : vector<1x32xf32>
    %140 = arith.mulf %135, %139 : vector<1x32xf32>
    %141 = vector.extract_strided_slice %140 {offsets = [0, 0], sizes = [1, 16], strides = [1, 1]} : vector<1x32xf32> to vector<1x16xf32>
    %142 = arith.index_cast %c4_i32 : i32 to index
    %c0_41 = arith.constant 0 : index
    %143 = vector.load %arg6[%142, %c0_41] : memref<8x16xf32, #tpu.memory_space<vmem>>, vector<1x16xf32>
    tpu.vector_store %arg6[%142, %c0_41], %141 {strides = array<i32>} : memref<8x16xf32, #tpu.memory_space<vmem>>, vector<1x16xf32>,
    %144 = vector.extract_strided_slice %140 {offsets = [0, 16], sizes = [1, 16], strides = [1, 1]} : vector<1x32xf32> to vector<1x16xf32>
    %c7_i32_42 = arith.constant 7 : i32
    %145 = arith.subi %c7_i32_42, %c4_i32 : i32
    %146 = arith.index_cast %145 : i32 to index
    %c0_43 = arith.constant 0 : index
    %147 = vector.load %arg7[%146, %c0_43] : memref<8x16xf32, #tpu.memory_space<vmem>>, vector<1x16xf32>
    tpu.vector_store %arg7[%146, %c0_43], %144 {strides = array<i32>} : memref<8x16xf32, #tpu.memory_space<vmem>>, vector<1x16xf32>,
    %c5_i32 = arith.constant 5 : i32
    %148 = arith.index_cast %c5_i32 : i32 to index
    %c0_44 = arith.constant 0 : index
    %149 = vector.load %arg10[%148, %c0_44] : memref<8x128xf32, #tpu.memory_space<vmem>>, vector<1x128xf32>
    %cst_45 = arith.constant dense<0.000000e+00> : vector<1x128xf32>
    %150 = tpu.matmul %140, %10, %cst_45 {dimension_numbers = #tpu.dot_dimension_numbers<[1], [0], [0], [1], [0, 0, 1, 1], [], []>} : vector<1x32xf32>, vector<32x128xf32>, vector<1x128xf32> -> vector<1x128xf32>
    %151 = arith.addf %149, %150 : vector<1x128xf32>
    %152 = vector.extract_strided_slice %151 {offsets = [0, 0], sizes = [1, 96], strides = [1, 1]} : vector<1x128xf32> to vector<1x96xf32>
    %153 = arith.negf %152 : vector<1x96xf32>
    %154 = math.exp %153 : vector<1x96xf32>
    %cst_46 = arith.constant 1.000000e+00 : f32
    %155 = vector.broadcast %cst_46 : f32 to vector<1x96xf32>
    %156 = arith.addf %155, %154 : vector<1x96xf32>
    %157 = arith.divf %155, %156 : vector<1x96xf32>
    %158 = vector.extract_strided_slice %151 {offsets = [0, 96], sizes = [1, 32], strides = [1, 1]} : vector<1x128xf32> to vector<1x32xf32>
    %159 = math.tanh %158 : vector<1x32xf32>
    %160 = vector.extract_strided_slice %157 {offsets = [0, 0], sizes = [1, 32], strides = [1, 1]} : vector<1x96xf32> to vector<1x32xf32>
    %161 = vector.extract_strided_slice %157 {offsets = [0, 32], sizes = [1, 32], strides = [1, 1]} : vector<1x96xf32> to vector<1x32xf32>
    %162 = vector.extract_strided_slice %157 {offsets = [0, 64], sizes = [1, 32], strides = [1, 1]} : vector<1x96xf32> to vector<1x32xf32>
    %163 = arith.mulf %161, %138 : vector<1x32xf32>
    %164 = arith.mulf %160, %159 : vector<1x32xf32>
    %165 = arith.addf %163, %164 : vector<1x32xf32>
    %166 = math.tanh %165 : vector<1x32xf32>
    %167 = arith.mulf %162, %166 : vector<1x32xf32>
    %168 = vector.extract_strided_slice %167 {offsets = [0, 0], sizes = [1, 16], strides = [1, 1]} : vector<1x32xf32> to vector<1x16xf32>
    %169 = arith.index_cast %c5_i32 : i32 to index
    %c0_47 = arith.constant 0 : index
    %170 = vector.load %arg6[%169, %c0_47] : memref<8x16xf32, #tpu.memory_space<vmem>>, vector<1x16xf32>
    tpu.vector_store %arg6[%169, %c0_47], %168 {strides = array<i32>} : memref<8x16xf32, #tpu.memory_space<vmem>>, vector<1x16xf32>,
    %171 = vector.extract_strided_slice %167 {offsets = [0, 16], sizes = [1, 16], strides = [1, 1]} : vector<1x32xf32> to vector<1x16xf32>
    %c7_i32_48 = arith.constant 7 : i32
    %172 = arith.subi %c7_i32_48, %c5_i32 : i32
    %173 = arith.index_cast %172 : i32 to index
    %c0_49 = arith.constant 0 : index
    %174 = vector.load %arg7[%173, %c0_49] : memref<8x16xf32, #tpu.memory_space<vmem>>, vector<1x16xf32>
    tpu.vector_store %arg7[%173, %c0_49], %171 {strides = array<i32>} : memref<8x16xf32, #tpu.memory_space<vmem>>, vector<1x16xf32>,
    %c6_i32 = arith.constant 6 : i32
    %175 = arith.index_cast %c6_i32 : i32 to index
    %c0_50 = arith.constant 0 : index
    %176 = vector.load %arg10[%175, %c0_50] : memref<8x128xf32, #tpu.memory_space<vmem>>, vector<1x128xf32>
    %cst_51 = arith.constant dense<0.000000e+00> : vector<1x128xf32>
    %177 = tpu.matmul %167, %10, %cst_51 {dimension_numbers = #tpu.dot_dimension_numbers<[1], [0], [0], [1], [0, 0, 1, 1], [], []>} : vector<1x32xf32>, vector<32x128xf32>, vector<1x128xf32> -> vector<1x128xf32>
    %178 = arith.addf %176, %177 : vector<1x128xf32>
    %179 = vector.extract_strided_slice %178 {offsets = [0, 0], sizes = [1, 96], strides = [1, 1]} : vector<1x128xf32> to vector<1x96xf32>
    %180 = arith.negf %179 : vector<1x96xf32>
    %181 = math.exp %180 : vector<1x96xf32>
    %cst_52 = arith.constant 1.000000e+00 : f32
    %182 = vector.broadcast %cst_52 : f32 to vector<1x96xf32>
    %183 = arith.addf %182, %181 : vector<1x96xf32>
    %184 = arith.divf %182, %183 : vector<1x96xf32>
    %185 = vector.extract_strided_slice %178 {offsets = [0, 96], sizes = [1, 32], strides = [1, 1]} : vector<1x128xf32> to vector<1x32xf32>
    %186 = math.tanh %185 : vector<1x32xf32>
    %187 = vector.extract_strided_slice %184 {offsets = [0, 0], sizes = [1, 32], strides = [1, 1]} : vector<1x96xf32> to vector<1x32xf32>
    %188 = vector.extract_strided_slice %184 {offsets = [0, 32], sizes = [1, 32], strides = [1, 1]} : vector<1x96xf32> to vector<1x32xf32>
    %189 = vector.extract_strided_slice %184 {offsets = [0, 64], sizes = [1, 32], strides = [1, 1]} : vector<1x96xf32> to vector<1x32xf32>
    %190 = arith.mulf %188, %165 : vector<1x32xf32>
    %191 = arith.mulf %187, %186 : vector<1x32xf32>
    %192 = arith.addf %190, %191 : vector<1x32xf32>
    %193 = math.tanh %192 : vector<1x32xf32>
    %194 = arith.mulf %189, %193 : vector<1x32xf32>
    %195 = vector.extract_strided_slice %194 {offsets = [0, 0], sizes = [1, 16], strides = [1, 1]} : vector<1x32xf32> to vector<1x16xf32>
    %196 = arith.index_cast %c6_i32 : i32 to index
    %c0_53 = arith.constant 0 : index
    %197 = vector.load %arg6[%196, %c0_53] : memref<8x16xf32, #tpu.memory_space<vmem>>, vector<1x16xf32>
    tpu.vector_store %arg6[%196, %c0_53], %195 {strides = array<i32>} : memref<8x16xf32, #tpu.memory_space<vmem>>, vector<1x16xf32>,
    %198 = vector.extract_strided_slice %194 {offsets = [0, 16], sizes = [1, 16], strides = [1, 1]} : vector<1x32xf32> to vector<1x16xf32>
    %c7_i32_54 = arith.constant 7 : i32
    %199 = arith.subi %c7_i32_54, %c6_i32 : i32
    %200 = arith.index_cast %199 : i32 to index
    %c0_55 = arith.constant 0 : index
    %201 = vector.load %arg7[%200, %c0_55] : memref<8x16xf32, #tpu.memory_space<vmem>>, vector<1x16xf32>
    tpu.vector_store %arg7[%200, %c0_55], %198 {strides = array<i32>} : memref<8x16xf32, #tpu.memory_space<vmem>>, vector<1x16xf32>,
    %c7_i32_56 = arith.constant 7 : i32
    %202 = arith.index_cast %c7_i32_56 : i32 to index
    %c0_57 = arith.constant 0 : index
    %203 = vector.load %arg10[%202, %c0_57] : memref<8x128xf32, #tpu.memory_space<vmem>>, vector<1x128xf32>
    %cst_58 = arith.constant dense<0.000000e+00> : vector<1x128xf32>
    %204 = tpu.matmul %194, %10, %cst_58 {dimension_numbers = #tpu.dot_dimension_numbers<[1], [0], [0], [1], [0, 0, 1, 1], [], []>} : vector<1x32xf32>, vector<32x128xf32>, vector<1x128xf32> -> vector<1x128xf32>
    %205 = arith.addf %203, %204 : vector<1x128xf32>
    %206 = vector.extract_strided_slice %205 {offsets = [0, 0], sizes = [1, 96], strides = [1, 1]} : vector<1x128xf32> to vector<1x96xf32>
    %207 = arith.negf %206 : vector<1x96xf32>
    %208 = math.exp %207 : vector<1x96xf32>
    %cst_59 = arith.constant 1.000000e+00 : f32
    %209 = vector.broadcast %cst_59 : f32 to vector<1x96xf32>
    %210 = arith.addf %209, %208 : vector<1x96xf32>
    %211 = arith.divf %209, %210 : vector<1x96xf32>
    %212 = vector.extract_strided_slice %205 {offsets = [0, 96], sizes = [1, 32], strides = [1, 1]} : vector<1x128xf32> to vector<1x32xf32>
    %213 = math.tanh %212 : vector<1x32xf32>
    %214 = vector.extract_strided_slice %211 {offsets = [0, 0], sizes = [1, 32], strides = [1, 1]} : vector<1x96xf32> to vector<1x32xf32>
    %215 = vector.extract_strided_slice %211 {offsets = [0, 32], sizes = [1, 32], strides = [1, 1]} : vector<1x96xf32> to vector<1x32xf32>
    %216 = vector.extract_strided_slice %211 {offsets = [0, 64], sizes = [1, 32], strides = [1, 1]} : vector<1x96xf32> to vector<1x32xf32>
    %217 = arith.mulf %215, %192 : vector<1x32xf32>
    %218 = arith.mulf %214, %213 : vector<1x32xf32>
    %219 = arith.addf %217, %218 : vector<1x32xf32>
    %220 = math.tanh %219 : vector<1x32xf32>
    %221 = arith.mulf %216, %220 : vector<1x32xf32>
    %222 = vector.extract_strided_slice %221 {offsets = [0, 0], sizes = [1, 16], strides = [1, 1]} : vector<1x32xf32> to vector<1x16xf32>
    %223 = arith.index_cast %c7_i32_56 : i32 to index
    %c0_60 = arith.constant 0 : index
    %224 = vector.load %arg6[%223, %c0_60] : memref<8x16xf32, #tpu.memory_space<vmem>>, vector<1x16xf32>
    tpu.vector_store %arg6[%223, %c0_60], %222 {strides = array<i32>} : memref<8x16xf32, #tpu.memory_space<vmem>>, vector<1x16xf32>,
    %225 = vector.extract_strided_slice %221 {offsets = [0, 16], sizes = [1, 16], strides = [1, 1]} : vector<1x32xf32> to vector<1x16xf32>
    %c7_i32_61 = arith.constant 7 : i32
    %226 = arith.subi %c7_i32_61, %c7_i32_56 : i32
    %227 = arith.index_cast %226 : i32 to index
    %c0_62 = arith.constant 0 : index
    %228 = vector.load %arg7[%227, %c0_62] : memref<8x16xf32, #tpu.memory_space<vmem>>, vector<1x16xf32>
    tpu.vector_store %arg7[%227, %c0_62], %225 {strides = array<i32>} : memref<8x16xf32, #tpu.memory_space<vmem>>, vector<1x16xf32>,
    %c8_i32 = arith.constant 8 : i32
    %c0_63 = arith.constant 0 : index
    %c0_64 = arith.constant 0 : index
    %229 = vector.load %arg8[%c0_63, %c0_64] : memref<1x32xf32, #tpu.memory_space<vmem>>, vector<1x32xf32>
    tpu.vector_store %arg8[%c0_63, %c0_64], %221 {strides = array<i32>} : memref<1x32xf32, #tpu.memory_space<vmem>>, vector<1x32xf32>,
    %c0_65 = arith.constant 0 : index
    %c0_66 = arith.constant 0 : index
    %230 = vector.load %arg9[%c0_65, %c0_66] : memref<1x32xf32, #tpu.memory_space<vmem>>, vector<1x32xf32>
    tpu.vector_store %arg9[%c0_65, %c0_66], %219 {strides = array<i32>} : memref<1x32xf32, #tpu.memory_space<vmem>>, vector<1x32xf32>,
    return
  }
  func.func @transform_0(%arg0: i32) -> (i32, i32) {
    %c0_i32 = arith.constant 0 : i32
    %c0_i32_0 = arith.constant 0 : i32
    return %arg0, %c0_i32 : i32, i32
  }
  func.func @transform_1(%arg0: i32) -> (i32, i32) {
    %c0_i32 = arith.constant 0 : i32
    %c0_i32_0 = arith.constant 0 : i32
    %c0_i32_1 = arith.constant 0 : i32
    return %c0_i32, %c0_i32_0 : i32, i32
  }
  func.func @transform_2(%arg0: i32) -> (i32, i32) {
    %c0_i32 = arith.constant 0 : i32
    %c0_i32_0 = arith.constant 0 : i32
    %c0_i32_1 = arith.constant 0 : i32
    return %c0_i32, %c0_i32_0 : i32, i32
  }
  func.func @transform_3(%arg0: i32) -> (i32, i32) {
    %c0_i32 = arith.constant 0 : i32
    %c0_i32_0 = arith.constant 0 : i32
    %c0_i32_1 = arith.constant 0 : i32
    return %c0_i32, %c0_i32_0 : i32, i32
  }
  func.func @transform_4(%arg0: i32) -> (i32, i32) {
    %c0_i32 = arith.constant 0 : i32
    %c0_i32_0 = arith.constant 0 : i32
    %c0_i32_1 = arith.constant 0 : i32
    return %c0_i32, %c0_i32_0 : i32, i32
  }
  func.func @transform_5(%arg0: i32) -> (i32, i32) {
    %c0_i32 = arith.constant 0 : i32
    %c0_i32_0 = arith.constant 0 : i32
    return %arg0, %c0_i32 : i32, i32
  }
  func.func @transform_6(%arg0: i32) -> (i32, i32) {
    %c0_i32 = arith.constant 0 : i32
    %0 = arith.subi %c0_i32, %arg0 : i32
    %c0_i32_0 = arith.constant 0 : i32
    %c0_i32_1 = arith.constant 0 : i32
    return %0, %c0_i32_0 : i32, i32
  }
}

</mosaic_0001>

<llo_original>
// kernel: simple_bilstm_pallas.1
$region0: #{simple_bilstm_pallas.1}
  #allocation0 [shape = 'u32[]', space=smem, size = 0x4, offset = 0x4, fixed_abs, tag = 'smem constant byte address 0x4 - core index']
  #allocation1 [shape = 'u32[72,128]{1,0:T(1,128)}', space=vmem, size = 0x9000, scoped, tag = 'internal scratch']
  #allocation2 [shape = 'f32[1,32]{1,0:T(1,128)}', space=vmem, size = 0x200, scoped, tag = 'scratch operand']
  #allocation3 [shape = 'f32[1,32]{1,0:T(1,128)}', space=vmem, size = 0x200, scoped, tag = 'scratch operand']
  #allocation4 [shape = 'f32[8,128]{1,0:T(8,128)}', space=vmem, size = 0x1000, scoped, tag = 'scratch operand']
  %s0 = inlined_call_operand.vmem [shape: f32[8,32], index: 0, kind: input, shape index: {}]
  %s1 = inlined_call_operand.vmem [shape: f32[32,128], index: 1, kind: input, shape index: {}]
  %s2 = inlined_call_operand.vmem [shape: f32[32,128], index: 2, kind: input, shape index: {}]
  %s3 = inlined_call_operand.vmem [shape: f32[1,128], index: 3, kind: input, shape index: {}]
  %s4 = inlined_call_operand.vmem [shape: f32[2,32], index: 4, kind: input, shape index: {}]
  %s5 = inlined_call_operand.vmem [shape: f32[8,16], index: 5, kind: output, shape index: {0}]
  %s6 = inlined_call_operand.vmem [shape: f32[8,16], index: 6, kind: output, shape index: {1}]
  %7 = xla_tuple %s5, %s6
  %s8 = sld [smem:[#allocation0]]
  $region42: #{simple_bilstm_pallas.1} parent=0
    _
  %s10 = ssub.s32 1, %s8
  %s11 = scalar_select 0, %s10, %s8
  // Predicated region
  $region2: #{simple_bilstm_pallas.1} parent=0 // pred_check
    _
  $region3: #{simple_bilstm_pallas.1} parent=0 // pred_check_branch
    %13 = sbr.rel (0) target = $region5
  $region4: #{simple_bilstm_pallas.1} parent=0 // pred_region
    _
  $region5: #{simple_bilstm_pallas.1} parent=0 // pred_fallthru
    _
  // Predicated region
  $region6: #{simple_bilstm_pallas.1} parent=0 // pred_check
    _
  $region7: #{simple_bilstm_pallas.1} parent=0 // pred_check_branch
    %15 = sbr.rel (0) target = $region9
  $region8: #{simple_bilstm_pallas.1} parent=0 // pred_region
    _
  $region9: #{simple_bilstm_pallas.1} parent=0 // pred_fallthru
    _
  // Predicated region
  $region10: #{simple_bilstm_pallas.1} parent=0 // pred_check
    _
  $region11: #{simple_bilstm_pallas.1} parent=0 // pred_check_branch
    %17 = sbr.rel (0) target = $region13
  $region12: #{simple_bilstm_pallas.1} parent=0 // pred_region
    _
  $region13: #{simple_bilstm_pallas.1} parent=0 // pred_fallthru
    _
  // Predicated region
  $region14: #{simple_bilstm_pallas.1} parent=0 // pred_check
    _
  $region15: #{simple_bilstm_pallas.1} parent=0 // pred_check_branch
    %19 = sbr.rel (0) target = $region17
  $region16: #{simple_bilstm_pallas.1} parent=0 // pred_region
    _
  $region17: #{simple_bilstm_pallas.1} parent=0 // pred_fallthru
    _
  // Predicated region
  $region18: #{simple_bilstm_pallas.1} parent=0 // pred_check
    _
  $region19: #{simple_bilstm_pallas.1} parent=0 // pred_check_branch
    %21 = sbr.rel (0) target = $region21
  $region20: #{simple_bilstm_pallas.1} parent=0 // pred_region
    _
  $region21: #{simple_bilstm_pallas.1} parent=0 // pred_fallthru
    _
  %s22 = ssub.s32 0, 0
  %p23 = scmp.lt.s32.totalorder %s22, 0
  %s24 = scalar_select %p23, %s22, 0
  %s25 = smul.addr %s24, 8
  %s26 = scalar_lea.vmem %s6, %s25
  %s27 = ssub.s32 0, 0
  %p28 = scmp.lt.s32.totalorder %s27, 0
  %s29 = scalar_select %p28, %s27, 0
  %s30 = smul.addr %s29, 8
  %s31 = scalar_lea.vmem %s6, %s30
  %s32 = ssub.s32 0, 0
  %p33 = scmp.eq.s32.totalorder 0, 0
  // Predicated region
  $region22: #{simple_bilstm_pallas.1} parent=0 // pred_check
    %p34 = pneg %p33
  $region23: #{simple_bilstm_pallas.1} parent=0 // pred_check_branch
    %36 = sbr.rel (%p34) target = $region25
  $region24: #{simple_bilstm_pallas.1} parent=0 // pred_region
    %v37 = vld [vmem:[%s4] sm:$0x1]
    %vm38 = vcmask 253952
    %39 = vst.msk [vmem:[#allocation2] sm:$0x1] %vm38, %v37
    %v40 = vld [vmem:[%s4 + $0x1] sm:$0x1]
    %41 = vst.msk [vmem:[#allocation3] sm:$0x1] %vm38, %v40
  $region25: #{simple_bilstm_pallas.1} parent=0 // pred_fallthru
    _
  %v42 = vld [vmem:[%s0] sm:$0xff]
  %v43 = vld [vmem:[%s1] sm:$0xff]
  %v44 = vld [vmem:[%s1 + $0x8] sm:$0xff]
  %v45 = vld [vmem:[%s1 + $0x10] sm:$0xff]
  %v46 = vld [vmem:[%s1 + $0x18] sm:$0xff]
  %v47 = vld [vmem:[%s3] sm:$0x1]
  %v49 = vperm.slane %v47, 0
  %vm51 = vcmask 261120
  %v53 = vsel %vm51, %v42, 0
  %55 = vmatpush.msra.mxu0 0.0
  %56 = vmatpush.msra.mxu0 0.0
  %57 = vmatpush.msra.mxu0 0.0
  %58 = vmatpush.msra.mxu0 0.0
  %59 = vmatpush.msra.mxu0 0.0
  %60 = vmatpush.msra.mxu0 0.0
  %61 = vmatpush.msra.mxu0 0.0
  %62 = vmatpush.msra.mxu0 0.0
  %63 = vmatpush.msra.mxu0 0.0
  %64 = vmatpush.msra.mxu0 0.0
  %65 = vmatpush.msra.mxu0 0.0
  %66 = vmatpush.msra.mxu0 0.0
  %67 = vmatpush.msra.mxu0 %v46
  %68 = vmatpush.msra.mxu0 %v45
  %69 = vmatpush.msra.mxu0 %v44
  %70 = vmatpush.msra.mxu0 %v43
  %71 = vmatmul.f32.gmra.mxu0 %v53
  %v72 = vpop.f32.mrf.mxu0
  %v73 = vadd.f32 %v49, %v72
  %74 = vdwg.mxu0
  %75 = vst [vmem:[#allocation4] sm:$0xff] %v73
  %v76 = vld [vmem:[%s2] sm:$0xff]
  %v77 = vld [vmem:[%s2 + $0x8] sm:$0xff]
  %v78 = vld [vmem:[%s2 + $0x10] sm:$0xff]
  %v79 = vld [vmem:[%s2 + $0x18] sm:$0xff]
  %v80 = vld [vmem:[#allocation2] sm:$0x1]
  %v81 = vld [vmem:[#allocation3] sm:$0x1]
  %v82 = vld [vmem:[#allocation4] sm:$0x1]
  %v84 = vsel %vm51, %v80, 0
  %86 = vmatpush.msra.mxu0 0.0
  %87 = vmatpush.msra.mxu0 0.0
  %88 = vmatpush.msra.mxu0 0.0
  %89 = vmatpush.msra.mxu0 0.0
  %90 = vmatpush.msra.mxu0 0.0
  %91 = vmatpush.msra.mxu0 0.0
  %92 = vmatpush.msra.mxu0 0.0
  %93 = vmatpush.msra.mxu0 0.0
  %94 = vmatpush.msra.mxu0 0.0
  %95 = vmatpush.msra.mxu0 0.0
  %96 = vmatpush.msra.mxu0 0.0
  %97 = vmatpush.msra.mxu0 0.0
  %98 = vmatpush.msra.mxu0 %v79
  %99 = vmatpush.msra.mxu0 %v78
  %100 = vmatpush.msra.mxu0 %v77
  %101 = vmatpush.msra.mxu0 %v76
  %102 = vmatmul.f32.gmra.mxu0 %v84
  %v103 = vpop.f32.mrf.mxu0
  %v104 = vadd.f32 0.0, %v103
  %105 = vdwg.mxu0
  %v106 = vadd.f32 %v82, %v104
  %v107 = vxor.u32 %v106, 2147483648
  %v108 = vmul.f32 %v107, 1.442695
  %v109 = vpow.pop %v108
  %v110 = vadd.f32 %v109, 1.0
  %v111 = vrcp.pop %v110
  %v112 = vmul.f32 %v110, %v111
  %v113 = vsub.f32 1.0, %v112
  %v114 = vmul.f32 %v111, %v113
  %v115 = vadd.f32 %v111, %v114
  %vm116 = vweird.f32 %v110
  %vm117 = vweird.f32 %v111
  %vm118 = vmor %vm116, %vm117
  %v119 = vsel %vm118, %v111, %v115
  %v120 = vand.u32 2147483647, %v110
  %vm121 = vcmp.eq.f32.partialorder %v120, 8.507059e+37
  %v122 = vand.u32 %v110, 2147483648
  %v123 = vor.u32 1.1754944e-38, %v122
  %v124 = vsel %vm121, %v123, %v119
  %v125 = vmul.f32 1.0, %v124
  %v126 = vtanh.pop %v106
  %v128 = vperm.slane %v81, 0
  %129 = vrot.lane.b32.xlu0 %v128, 32
  %v130 = vpop.permute.xlu0 %129
  %v132 = vmul.f32 %v125, %v130
  %134 = vrot.lane.b32.xlu0 %v126, 32
  %v135 = vpop.permute.xlu0 %134
  %v137 = vmul.f32 %v125, %v135
  %139 = vrot.lane.b32.xlu0 %v137, 32
  %v140 = vpop.permute.xlu0 %139
  %v142 = vadd.f32 %v132, %v140
  %v143 = vtanh.pop %v142
  %145 = vrot.lane.b32.xlu0 %v143, 32
  %v146 = vpop.permute.xlu0 %145
  %v148 = vmul.f32 %v125, %v146
  %150 = vrot.lane.b32.xlu0 %v148, 64
  %v151 = vpop.permute.xlu0 %150
  %vm153 = vcmask 122880
  %154 = vst.msk [vmem:[%s5] sm:$0x1] %vm153, %v151
  %155 = vrot.lane.b32.xlu0 %v148, 48
  %v156 = vpop.permute.xlu0 %155
  %158 = vst.msk [vmem:[%s31 + $0x7] sm:$0x1] %vm153, %v156
  %v159 = vld [vmem:[#allocation4 + $0x1] sm:$0x1]
  %v160 = vsel %vm51, %v151, 0
  %162 = vmatpush.msra.mxu0 0.0
  %163 = vmatpush.msra.mxu0 0.0
  %164 = vmatpush.msra.mxu0 0.0
  %165 = vmatpush.msra.mxu0 0.0
  %166 = vmatpush.msra.mxu0 0.0
  %167 = vmatpush.msra.mxu0 0.0
  %168 = vmatpush.msra.mxu0 0.0
  %169 = vmatpush.msra.mxu0 0.0
  %170 = vmatpush.msra.mxu0 0.0
  %171 = vmatpush.msra.mxu0 0.0
  %172 = vmatpush.msra.mxu0 0.0
  %173 = vmatpush.msra.mxu0 0.0
  %174 = vmatpush.msra.mxu0 %v79
  %175 = vmatpush.msra.mxu0 %v78
  %176 = vmatpush.msra.mxu0 %v77
  %177 = vmatpush.msra.mxu0 %v76
  %178 = vmatmul.f32.gmra.mxu0 %v160
  %v179 = vpop.f32.mrf.mxu0
  %v180 = vadd.f32 0.0, %v179
  %181 = vdwg.mxu0
  %v182 = vadd.f32 %v159, %v180
  %v183 = vxor.u32 %v182, 2147483648
  %v184 = vmul.f32 %v183, 1.442695
  %v185 = vpow.pop %v184
  %v186 = vadd.f32 %v185, 1.0
  %v187 = vrcp.pop %v186
  %v188 = vmul.f32 %v186, %v187
  %v189 = vsub.f32 1.0, %v188
  %v190 = vmul.f32 %v187, %v189
  %v191 = vadd.f32 %v187, %v190
  %vm192 = vweird.f32 %v186
  %vm193 = vweird.f32 %v187
  %vm194 = vmor %vm192, %vm193
  %v195 = vsel %vm194, %v187, %v191
  %v196 = vand.u32 2147483647, %v186
  %vm197 = vcmp.eq.f32.partialorder %v196, 8.507059e+37
  %v198 = vand.u32 %v186, 2147483648
  %v199 = vor.u32 1.1754944e-38, %v198
  %v200 = vsel %vm197, %v199, %v195
  %v201 = vmul.f32 1.0, %v200
  %v202 = vtanh.pop %v182
  %v203 = vmul.f32 %v201, %v142
  %205 = vrot.lane.b32.xlu0 %v202, 32
  %v206 = vpop.permute.xlu0 %205
  %v208 = vmul.f32 %v201, %v206
  %210 = vrot.lane.b32.xlu0 %v208, 32
  %v211 = vpop.permute.xlu0 %210
  %v213 = vadd.f32 %v203, %v211
  %v214 = vtanh.pop %v213
  %216 = vrot.lane.b32.xlu0 %v214, 32
  %v217 = vpop.permute.xlu0 %216
  %v219 = vmul.f32 %v201, %v217
  %221 = vrot.lane.b32.xlu0 %v219, 64
  %v222 = vpop.permute.xlu0 %221
  %224 = vst.msk [vmem:[%s5 + $0x1] sm:$0x1] %vm153, %v222
  %225 = vrot.lane.b32.xlu0 %v219, 48
  %v226 = vpop.permute.xlu0 %225
  %228 = vst.msk [vmem:[%s31 + $0x6] sm:$0x1] %vm153, %v226
  %v229 = vld [vmem:[#allocation4 + $0x2] sm:$0x1]
  %v230 = vsel %vm51, %v222, 0
  %232 = vmatpush.msra.mxu0 0.0
  %233 = vmatpush.msra.mxu0 0.0
  %234 = vmatpush.msra.mxu0 0.0
  %235 = vmatpush.msra.mxu0 0.0
  %236 = vmatpush.msra.mxu0 0.0
  %237 = vmatpush.msra.mxu0 0.0
  %238 = vmatpush.msra.mxu0 0.0
  %239 = vmatpush.msra.mxu0 0.0
  %240 = vmatpush.msra.mxu0 0.0
  %241 = vmatpush.msra.mxu0 0.0
  %242 = vmatpush.msra.mxu0 0.0
  %243 = vmatpush.msra.mxu0 0.0
  %244 = vmatpush.msra.mxu0 %v79
  %245 = vmatpush.msra.mxu0 %v78
  %246 = vmatpush.msra.mxu0 %v77
  %247 = vmatpush.msra.mxu0 %v76
  %248 = vmatmul.f32.gmra.mxu0 %v230
  %v249 = vpop.f32.mrf.mxu0
  %v250 = vadd.f32 0.0, %v249
  %251 = vdwg.mxu0
  %v252 = vadd.f32 %v229, %v250
  %v253 = vxor.u32 %v252, 2147483648
  %v254 = vmul.f32 %v253, 1.442695
  %v255 = vpow.pop %v254
  %v256 = vadd.f32 %v255, 1.0
  %v257 = vrcp.pop %v256
  %v258 = vmul.f32 %v256, %v257
  %v259 = vsub.f32 1.0, %v258
  %v260 = vmul.f32 %v257, %v259
  %v261 = vadd.f32 %v257, %v260
  %vm262 = vweird.f32 %v256
  %vm263 = vweird.f32 %v257
  %vm264 = vmor %vm262, %vm263
  %v265 = vsel %vm264, %v257, %v261
  %v266 = vand.u32 2147483647, %v256
  %vm267 = vcmp.eq.f32.partialorder %v266, 8.507059e+37
  %v268 = vand.u32 %v256, 2147483648
  %v269 = vor.u32 1.1754944e-38, %v268
  %v270 = vsel %vm267, %v269, %v265
  %v271 = vmul.f32 1.0, %v270
  %v272 = vtanh.pop %v252
  %v273 = vmul.f32 %v271, %v213
  %275 = vrot.lane.b32.xlu0 %v272, 32
  %v276 = vpop.permute.xlu0 %275
  %v278 = vmul.f32 %v271, %v276
  %280 = vrot.lane.b32.xlu0 %v278, 32
  %v281 = vpop.permute.xlu0 %280
  %v283 = vadd.f32 %v273, %v281
  %v284 = vtanh.pop %v283
  %286 = vrot.lane.b32.xlu0 %v284, 32
  %v287 = vpop.permute.xlu0 %286
  %v289 = vmul.f32 %v271, %v287
  %291 = vrot.lane.b32.xlu0 %v289, 64
  %v292 = vpop.permute.xlu0 %291
  %294 = vst.msk [vmem:[%s5 + $0x2] sm:$0x1] %vm153, %v292
  %295 = vrot.lane.b32.xlu0 %v289, 48
  %v296 = vpop.permute.xlu0 %295
  %298 = vst.msk [vmem:[%s31 + $0x5] sm:$0x1] %vm153, %v296
  %v299 = vld [vmem:[#allocation4 + $0x3] sm:$0x1]
  %v300 = vsel %vm51, %v292, 0
  %302 = vmatpush.msra.mxu0 0.0
  %303 = vmatpush.msra.mxu0 0.0
  %304 = vmatpush.msra.mxu0 0.0
  %305 = vmatpush.msra.mxu0 0.0
  %306 = vmatpush.msra.mxu0 0.0
  %307 = vmatpush.msra.mxu0 0.0
  %308 = vmatpush.msra.mxu0 0.0
  %309 = vmatpush.msra.mxu0 0.0
  %310 = vmatpush.msra.mxu0 0.0
  %311 = vmatpush.msra.mxu0 0.0
  %312 = vmatpush.msra.mxu0 0.0
  %313 = vmatpush.msra.mxu0 0.0
  %314 = vmatpush.msra.mxu0 %v79
  %315 = vmatpush.msra.mxu0 %v78
  %316 = vmatpush.msra.mxu0 %v77
  %317 = vmatpush.msra.mxu0 %v76
  %318 = vmatmul.f32.gmra.mxu0 %v300
  %v319 = vpop.f32.mrf.mxu0
  %v320 = vadd.f32 0.0, %v319
  %321 = vdwg.mxu0
  %v322 = vadd.f32 %v299, %v320
  %v323 = vxor.u32 %v322, 2147483648
  %v324 = vmul.f32 %v323, 1.442695
  %v325 = vpow.pop %v324
  %v326 = vadd.f32 %v325, 1.0
  %v327 = vrcp.pop %v326
  %v328 = vmul.f32 %v326, %v327
  %v329 = vsub.f32 1.0, %v328
  %v330 = vmul.f32 %v327, %v329
  %v331 = vadd.f32 %v327, %v330
  %vm332 = vweird.f32 %v326
  %vm333 = vweird.f32 %v327
  %vm334 = vmor %vm332, %vm333
  %v335 = vsel %vm334, %v327, %v331
  %v336 = vand.u32 2147483647, %v326
  %vm337 = vcmp.eq.f32.partialorder %v336, 8.507059e+37
  %v338 = vand.u32 %v326, 2147483648
  %v339 = vor.u32 1.1754944e-38, %v338
  %v340 = vsel %vm337, %v339, %v335
  %v341 = vmul.f32 1.0, %v340
  %v342 = vtanh.pop %v322
  %v343 = vmul.f32 %v341, %v283
  %345 = vrot.lane.b32.xlu0 %v342, 32
  %v346 = vpop.permute.xlu0 %345
  %v348 = vmul.f32 %v341, %v346
  %350 = vrot.lane.b32.xlu0 %v348, 32
  %v351 = vpop.permute.xlu0 %350
  %v353 = vadd.f32 %v343, %v351
  %v354 = vtanh.pop %v353
  %356 = vrot.lane.b32.xlu0 %v354, 32
  %v357 = vpop.permute.xlu0 %356
  %v359 = vmul.f32 %v341, %v357
  %361 = vrot.lane.b32.xlu0 %v359, 64
  %v362 = vpop.permute.xlu0 %361
  %364 = vst.msk [vmem:[%s5 + $0x3] sm:$0x1] %vm153, %v362
  %365 = vrot.lane.b32.xlu0 %v359, 48
  %v366 = vpop.permute.xlu0 %365
  %368 = vst.msk [vmem:[%s31 + $0x4] sm:$0x1] %vm153, %v366
  %v369 = vld [vmem:[#allocation4 + $0x4] sm:$0x1]
  %v370 = vsel %vm51, %v362, 0
  %372 = vmatpush.msra.mxu0 0.0
  %373 = vmatpush.msra.mxu0 0.0
  %374 = vmatpush.msra.mxu0 0.0
  %375 = vmatpush.msra.mxu0 0.0
  %376 = vmatpush.msra.mxu0 0.0
  %377 = vmatpush.msra.mxu0 0.0
  %378 = vmatpush.msra.mxu0 0.0
  %379 = vmatpush.msra.mxu0 0.0
  %380 = vmatpush.msra.mxu0 0.0
  %381 = vmatpush.msra.mxu0 0.0
  %382 = vmatpush.msra.mxu0 0.0
  %383 = vmatpush.msra.mxu0 0.0
  %384 = vmatpush.msra.mxu0 %v79
  %385 = vmatpush.msra.mxu0 %v78
  %386 = vmatpush.msra.mxu0 %v77
  %387 = vmatpush.msra.mxu0 %v76
  %388 = vmatmul.f32.gmra.mxu0 %v370
  %v389 = vpop.f32.mrf.mxu0
  %v390 = vadd.f32 0.0, %v389
  %391 = vdwg.mxu0
  %v392 = vadd.f32 %v369, %v390
  %v393 = vxor.u32 %v392, 2147483648
  %v394 = vmul.f32 %v393, 1.442695
  %v395 = vpow.pop %v394
  %v396 = vadd.f32 %v395, 1.0
  %v397 = vrcp.pop %v396
  %v398 = vmul.f32 %v396, %v397
  %v399 = vsub.f32 1.0, %v398
  %v400 = vmul.f32 %v397, %v399
  %v401 = vadd.f32 %v397, %v400
  %vm402 = vweird.f32 %v396
  %vm403 = vweird.f32 %v397
  %vm404 = vmor %vm402, %vm403
  %v405 = vsel %vm404, %v397, %v401
  %v406 = vand.u32 2147483647, %v396
  %vm407 = vcmp.eq.f32.partialorder %v406, 8.507059e+37
  %v408 = vand.u32 %v396, 2147483648
  %v409 = vor.u32 1.1754944e-38, %v408
  %v410 = vsel %vm407, %v409, %v405
  %v411 = vmul.f32 1.0, %v410
  %v412 = vtanh.pop %v392
  %v413 = vmul.f32 %v411, %v353
  %415 = vrot.lane.b32.xlu0 %v412, 32
  %v416 = vpop.permute.xlu0 %415
  %v418 = vmul.f32 %v411, %v416
  %420 = vrot.lane.b32.xlu0 %v418, 32
  %v421 = vpop.permute.xlu0 %420
  %v423 = vadd.f32 %v413, %v421
  %v424 = vtanh.pop %v423
  %426 = vrot.lane.b32.xlu0 %v424, 32
  %v427 = vpop.permute.xlu0 %426
  %v429 = vmul.f32 %v411, %v427
  %431 = vrot.lane.b32.xlu0 %v429, 64
  %v432 = vpop.permute.xlu0 %431
  %434 = vst.msk [vmem:[%s5 + $0x4] sm:$0x1] %vm153, %v432
  %435 = vrot.lane.b32.xlu0 %v429, 48
  %v436 = vpop.permute.xlu0 %435
  %438 = vst.msk [vmem:[%s31 + $0x3] sm:$0x1] %vm153, %v436
  %v439 = vld [vmem:[#allocation4 + $0x5] sm:$0x1]
  %v440 = vsel %vm51, %v432, 0
  %442 = vmatpush.msra.mxu0 0.0
  %443 = vmatpush.msra.mxu0 0.0
  %444 = vmatpush.msra.mxu0 0.0
  %445 = vmatpush.msra.mxu0 0.0
  %446 = vmatpush.msra.mxu0 0.0
  %447 = vmatpush.msra.mxu0 0.0
  %448 = vmatpush.msra.mxu0 0.0
  %449 = vmatpush.msra.mxu0 0.0
  %450 = vmatpush.msra.mxu0 0.0
  %451 = vmatpush.msra.mxu0 0.0
  %452 = vmatpush.msra.mxu0 0.0
  %453 = vmatpush.msra.mxu0 0.0
  %454 = vmatpush.msra.mxu0 %v79
  %455 = vmatpush.msra.mxu0 %v78
  %456 = vmatpush.msra.mxu0 %v77
  %457 = vmatpush.msra.mxu0 %v76
  %458 = vmatmul.f32.gmra.mxu0 %v440
  %v459 = vpop.f32.mrf.mxu0
  %v460 = vadd.f32 0.0, %v459
  %461 = vdwg.mxu0
  %v462 = vadd.f32 %v439, %v460
  %v463 = vxor.u32 %v462, 2147483648
  %v464 = vmul.f32 %v463, 1.442695
  %v465 = vpow.pop %v464
  %v466 = vadd.f32 %v465, 1.0
  %v467 = vrcp.pop %v466
  %v468 = vmul.f32 %v466, %v467
  %v469 = vsub.f32 1.0, %v468
  %v470 = vmul.f32 %v467, %v469
  %v471 = vadd.f32 %v467, %v470
  %vm472 = vweird.f32 %v466
  %vm473 = vweird.f32 %v467
  %vm474 = vmor %vm472, %vm473
  %v475 = vsel %vm474, %v467, %v471
  %v476 = vand.u32 2147483647, %v466
  %vm477 = vcmp.eq.f32.partialorder %v476, 8.507059e+37
  %v478 = vand.u32 %v466, 2147483648
  %v479 = vor.u32 1.1754944e-38, %v478
  %v480 = vsel %vm477, %v479, %v475
  %v481 = vmul.f32 1.0, %v480
  %v482 = vtanh.pop %v462
  %v483 = vmul.f32 %v481, %v423
  %485 = vrot.lane.b32.xlu0 %v482, 32
  %v486 = vpop.permute.xlu0 %485
  %v488 = vmul.f32 %v481, %v486
  %490 = vrot.lane.b32.xlu0 %v488, 32
  %v491 = vpop.permute.xlu0 %490
  %v493 = vadd.f32 %v483, %v491
  %v494 = vtanh.pop %v493
  %496 = vrot.lane.b32.xlu0 %v494, 32
  %v497 = vpop.permute.xlu0 %496
  %v499 = vmul.f32 %v481, %v497
  %501 = vrot.lane.b32.xlu0 %v499, 64
  %v502 = vpop.permute.xlu0 %501
  %504 = vst.msk [vmem:[%s5 + $0x5] sm:$0x1] %vm153, %v502
  %505 = vrot.lane.b32.xlu0 %v499, 48
  %v506 = vpop.permute.xlu0 %505
  %508 = vst.msk [vmem:[%s31 + $0x2] sm:$0x1] %vm153, %v506
  %v509 = vld [vmem:[#allocation4 + $0x6] sm:$0x1]
  %v510 = vsel %vm51, %v502, 0
  %512 = vmatpush.msra.mxu0 0.0
  %513 = vmatpush.msra.mxu0 0.0
  %514 = vmatpush.msra.mxu0 0.0
  %515 = vmatpush.msra.mxu0 0.0
  %516 = vmatpush.msra.mxu0 0.0
  %517 = vmatpush.msra.mxu0 0.0
  %518 = vmatpush.msra.mxu0 0.0
  %519 = vmatpush.msra.mxu0 0.0
  %520 = vmatpush.msra.mxu0 0.0
  %521 = vmatpush.msra.mxu0 0.0
  %522 = vmatpush.msra.mxu0 0.0
  %523 = vmatpush.msra.mxu0 0.0
  %524 = vmatpush.msra.mxu0 %v79
  %525 = vmatpush.msra.mxu0 %v78
  %526 = vmatpush.msra.mxu0 %v77
  %527 = vmatpush.msra.mxu0 %v76
  %528 = vmatmul.f32.gmra.mxu0 %v510
  %v529 = vpop.f32.mrf.mxu0
  %v530 = vadd.f32 0.0, %v529
  %531 = vdwg.mxu0
  %v532 = vadd.f32 %v509, %v530
  %v533 = vxor.u32 %v532, 2147483648
  %v534 = vmul.f32 %v533, 1.442695
  %v535 = vpow.pop %v534
  %v536 = vadd.f32 %v535, 1.0
  %v537 = vrcp.pop %v536
  %v538 = vmul.f32 %v536, %v537
  %v539 = vsub.f32 1.0, %v538
  %v540 = vmul.f32 %v537, %v539
  %v541 = vadd.f32 %v537, %v540
  %vm542 = vweird.f32 %v536
  %vm543 = vweird.f32 %v537
  %vm544 = vmor %vm542, %vm543
  %v545 = vsel %vm544, %v537, %v541
  %v546 = vand.u32 2147483647, %v536
  %vm547 = vcmp.eq.f32.partialorder %v546, 8.507059e+37
  %v548 = vand.u32 %v536, 2147483648
  %v549 = vor.u32 1.1754944e-38, %v548
  %v550 = vsel %vm547, %v549, %v545
  %v551 = vmul.f32 1.0, %v550
  %v552 = vtanh.pop %v532
  %v553 = vmul.f32 %v551, %v493
  %555 = vrot.lane.b32.xlu0 %v552, 32
  %v556 = vpop.permute.xlu0 %555
  %v558 = vmul.f32 %v551, %v556
  %560 = vrot.lane.b32.xlu0 %v558, 32
  %v561 = vpop.permute.xlu0 %560
  %v563 = vadd.f32 %v553, %v561
  %v564 = vtanh.pop %v563
  %566 = vrot.lane.b32.xlu0 %v564, 32
  %v567 = vpop.permute.xlu0 %566
  %v569 = vmul.f32 %v551, %v567
  %571 = vrot.lane.b32.xlu0 %v569, 64
  %v572 = vpop.permute.xlu0 %571
  %574 = vst.msk [vmem:[%s5 + $0x6] sm:$0x1] %vm153, %v572
  %575 = vrot.lane.b32.xlu0 %v569, 48
  %v576 = vpop.permute.xlu0 %575
  %578 = vst.msk [vmem:[%s31 + $0x1] sm:$0x1] %vm153, %v576
  %v579 = vld [vmem:[#allocation4 + $0x7] sm:$0x1]
  %v580 = vsel %vm51, %v572, 0
  %582 = vmatpush.msra.mxu0 0.0
  %583 = vmatpush.msra.mxu0 0.0
  %584 = vmatpush.msra.mxu0 0.0
  %585 = vmatpush.msra.mxu0 0.0
  %586 = vmatpush.msra.mxu0 0.0
  %587 = vmatpush.msra.mxu0 0.0
  %588 = vmatpush.msra.mxu0 0.0
  %589 = vmatpush.msra.mxu0 0.0
  %590 = vmatpush.msra.mxu0 0.0
  %591 = vmatpush.msra.mxu0 0.0
  %592 = vmatpush.msra.mxu0 0.0
  %593 = vmatpush.msra.mxu0 0.0
  %594 = vmatpush.msra.mxu0 %v79
  %595 = vmatpush.msra.mxu0 %v78
  %596 = vmatpush.msra.mxu0 %v77
  %597 = vmatpush.msra.mxu0 %v76
  %598 = vmatmul.f32.gmra.mxu0 %v580
  %v599 = vpop.f32.mrf.mxu0
  %v600 = vadd.f32 0.0, %v599
  %601 = vdwg.mxu0
  %v602 = vadd.f32 %v579, %v600
  %v603 = vxor.u32 %v602, 2147483648
  %v604 = vmul.f32 %v603, 1.442695
  %v605 = vpow.pop %v604
  %v606 = vadd.f32 %v605, 1.0
  %v607 = vrcp.pop %v606
  %v608 = vmul.f32 %v606, %v607
  %v609 = vsub.f32 1.0, %v608
  %v610 = vmul.f32 %v607, %v609
  %v611 = vadd.f32 %v607, %v610
  %vm612 = vweird.f32 %v606
  %vm613 = vweird.f32 %v607
  %vm614 = vmor %vm612, %vm613
  %v615 = vsel %vm614, %v607, %v611
  %v616 = vand.u32 2147483647, %v606
  %vm617 = vcmp.eq.f32.partialorder %v616, 8.507059e+37
  %v618 = vand.u32 %v606, 2147483648
  %v619 = vor.u32 1.1754944e-38, %v618
  %v620 = vsel %vm617, %v619, %v615
  %v621 = vmul.f32 1.0, %v620
  %v622 = vtanh.pop %v602
  %v623 = vmul.f32 %v621, %v563
  %625 = vrot.lane.b32.xlu0 %v622, 32
  %v626 = vpop.permute.xlu0 %625
  %v628 = vmul.f32 %v621, %v626
  %630 = vrot.lane.b32.xlu0 %v628, 32
  %v631 = vpop.permute.xlu0 %630
  %v633 = vadd.f32 %v623, %v631
  %v634 = vtanh.pop %v633
  %636 = vrot.lane.b32.xlu0 %v634, 32
  %v637 = vpop.permute.xlu0 %636
  %v639 = vmul.f32 %v621, %v637
  %641 = vrot.lane.b32.xlu0 %v639, 64
  %v642 = vpop.permute.xlu0 %641
  %644 = vst.msk [vmem:[%s5 + $0x7] sm:$0x1] %vm153, %v642
  %645 = vrot.lane.b32.xlu0 %v639, 48
  %v646 = vpop.permute.xlu0 %645
  %648 = vst.msk [vmem:[%s31] sm:$0x1] %vm153, %v646
  %vm649 = vcmask 253952
  %650 = vst.msk [vmem:[#allocation2] sm:$0x1] %vm649, %v642
  %652 = vrot.lane.b32.xlu0 %v633, 96
  %v653 = vpop.permute.xlu0 %652
  %655 = vst.msk [vmem:[#allocation3] sm:$0x1] %vm649, %v653
  %s656 = ssub.s32 0, 0
  %p657 = scmp.lt.s32.totalorder %s656, 0
  %s658 = scalar_select %p657, %s656, 0
  %s659 = smul.addr %s658, 8
  %s660 = scalar_lea.vmem %s6, %s659
  // Predicated region
  $region26: #{simple_bilstm_pallas.1} parent=0 // pred_check
    _
  $region27: #{simple_bilstm_pallas.1} parent=0 // pred_check_branch
    %662 = sbr.rel (0) target = $region29
  $region28: #{simple_bilstm_pallas.1} parent=0 // pred_region
    _
  $region29: #{simple_bilstm_pallas.1} parent=0 // pred_fallthru
    _
  // Predicated region
  $region30: #{simple_bilstm_pallas.1} parent=0 // pred_check
    _
  $region31: #{simple_bilstm_pallas.1} parent=0 // pred_check_branch
    %664 = sbr.rel (0) target = $region33
  $region32: #{simple_bilstm_pallas.1} parent=0 // pred_region
    %s665 = ssub.s32 0, 0
  $region33: #{simple_bilstm_pallas.1} parent=0 // pred_fallthru
    _
  // Predicated region
  $region34: #{simple_bilstm_pallas.1} parent=0 // pred_check
    _
  $region35: #{simple_bilstm_pallas.1} parent=0 // pred_check_branch
    %667 = sbr.rel (0) target = $region37
  $region36: #{simple_bilstm_pallas.1} parent=0 // pred_region
    _
  $region37: #{simple_bilstm_pallas.1} parent=0 // pred_fallthru
    _
  // Predicated region
  $region38: #{simple_bilstm_pallas.1} parent=0 // pred_check
    _
  $region39: #{simple_bilstm_pallas.1} parent=0 // pred_check_branch
    %669 = sbr.rel (0) target = $region41
  $region40: #{simple_bilstm_pallas.1} parent=0 // pred_region
    %s670 = ssub.s32 0, 0
    %p671 = scmp.lt.s32.totalorder %s670, 0
    %s672 = scalar_select %p671, %s670, 0
    %s673 = smul.addr %s672, 8
    %s674 = scalar_lea.vmem %s6, %s673
  $region41: #{simple_bilstm_pallas.1} parent=0 // pred_fallthru
    _

</llo_original>
